<compile_context>
chip_gen: v6e
topology: v6e:2x2x1
jax: 0.10.0
libtpu: 0.0.40
codegen_flags: <defaults>
</compile_context>

<pallas_src>
import jax
import jax.numpy as jnp
from jax.experimental import pallas as pl
from jax.experimental.pallas import tpu as pltpu


def _linear_kernel(x_ref, wb_ref, o_ref):
    # x_ref:  (12, 2) f32
    # wb_ref: (3, 3) f32  -- rows 0..1 = W^T (2,3), row 2 = bias (1,3)
    # o_ref:  (12, 3) f32
    x = x_ref[...]
    wb = wb_ref[...]
    # K=2 contraction as explicit VPU FMAs (MXU would be <0.01% utilized).
    y = x[:, 0:1] * wb[0:1, :] + x[:, 1:2] * wb[1:2, :] + wb[2:3, :]
    o_ref[...] = y.astype(o_ref.dtype)


def pack_params(weight, bias):
    """One-time parameter packing (outside the per-call hot path).

    weight: (3, 2) f32, bias: (3,) f32  ->  wb: (3, 3) f32
    rows 0..1 = weight.T, row 2 = bias.
    """
    return jnp.concatenate([weight.T, bias[None, :]], axis=0)


def model_forward(x, wb):
    """x: (4, 3, 2) f32; wb: (3, 3) packed params -> (12, 3) f32."""
    x2d = x.reshape(-1, 2)  # row-major flatten, regrouped to (-1, 2)

    out = pl.pallas_call(
        _linear_kernel,
        out_shape=jax.ShapeDtypeStruct((x2d.shape[0], 3), jnp.float32),
        in_specs=[
            pl.BlockSpec(memory_space=pltpu.MemorySpace.VMEM),
            pl.BlockSpec(memory_space=pltpu.MemorySpace.VMEM),
        ],
        out_specs=pl.BlockSpec(memory_space=pltpu.MemorySpace.VMEM),
        cost_estimate=pl.CostEstimate(
            flops=144, bytes_accessed=276, transcendentals=0
        ),
    )(x2d, wb)
    return out


if __name__ == "__main__":
    key = jax.random.PRNGKey(0)
    kx, kw, kb = jax.random.split(key, 3)

    # Input consistent with the module definition: (4, 3, 2)
    x = jax.random.normal(kx, (4, 3, 2), dtype=jnp.float32)

    # Deterministic parameter init mimicking nn.Linear(2, 3):
    # uniform(-1/sqrt(in_features), 1/sqrt(in_features))
    bound = 1.0 / jnp.sqrt(2.0)
    weight = jax.random.uniform(kw, (3, 2), dtype=jnp.float32,
                                minval=-bound, maxval=bound)
    bias = jax.random.uniform(kb, (3,), dtype=jnp.float32,
                              minval=-bound, maxval=bound)

    # Parameter packing happens once, outside the per-call path.
    wb = pack_params(weight, bias)
    jax.block_until_ready(wb)

    fwd = jax.jit(model_forward)
    out = fwd(x, wb)
    jax.block_until_ready(out)

    # Sanity check against plain-JAX reference of the same interpretation.
    ref = x.reshape(-1, 2) @ weight.T + bias[None, :]
    assert out.shape == (12, 3)
    assert jnp.allclose(out, ref, atol=1e-5, rtol=1e-5)

    print("KERNEL_OK")
</pallas_src>

<mosaic_0001>
module attributes {stable_mosaic.version = 11 : i64} {
  func.func @_linear_kernel(%arg0: memref<12x2xf32, #tpu.memory_space<vmem>>, %arg1: memref<3x3xf32, #tpu.memory_space<vmem>>, %arg2: memref<12x3xf32, #tpu.memory_space<vmem>>) attributes {dimension_semantics = [], scalar_prefetch = 0 : i64, scratch_operands = 0 : i64, tpu.core_type = #tpu.core_type<tc>} {
    %c0 = arith.constant 0 : index
    %c0_0 = arith.constant 0 : index
    %0 = vector.load %arg0[%c0, %c0_0] : memref<12x2xf32, #tpu.memory_space<vmem>>, vector<12x2xf32>
    %c0_1 = arith.constant 0 : index
    %c0_2 = arith.constant 0 : index
    %1 = vector.load %arg1[%c0_1, %c0_2] : memref<3x3xf32, #tpu.memory_space<vmem>>, vector<3x3xf32>
    %2 = vector.extract_strided_slice %0 {offsets = [0, 0], sizes = [12, 1], strides = [1, 1]} : vector<12x2xf32> to vector<12x1xf32>
    %3 = vector.extract_strided_slice %1 {offsets = [0, 0], sizes = [1, 3], strides = [1, 1]} : vector<3x3xf32> to vector<1x3xf32>
    %4 = vector.broadcast %2 : vector<12x1xf32> to vector<12x3xf32>
    %5 = vector.broadcast %3 : vector<1x3xf32> to vector<12x3xf32>
    %6 = arith.mulf %4, %5 : vector<12x3xf32>
    %7 = vector.extract_strided_slice %0 {offsets = [0, 1], sizes = [12, 1], strides = [1, 1]} : vector<12x2xf32> to vector<12x1xf32>
    %8 = vector.extract_strided_slice %1 {offsets = [1, 0], sizes = [1, 3], strides = [1, 1]} : vector<3x3xf32> to vector<1x3xf32>
    %9 = vector.broadcast %7 : vector<12x1xf32> to vector<12x3xf32>
    %10 = vector.broadcast %8 : vector<1x3xf32> to vector<12x3xf32>
    %11 = arith.mulf %9, %10 : vector<12x3xf32>
    %12 = arith.addf %6, %11 : vector<12x3xf32>
    %13 = vector.extract_strided_slice %1 {offsets = [2, 0], sizes = [1, 3], strides = [1, 1]} : vector<3x3xf32> to vector<1x3xf32>
    %14 = vector.broadcast %13 : vector<1x3xf32> to vector<12x3xf32>
    %15 = arith.addf %12, %14 : vector<12x3xf32>
    %c0_3 = arith.constant 0 : index
    %c0_4 = arith.constant 0 : index
    %16 = vector.load %arg2[%c0_3, %c0_4] : memref<12x3xf32, #tpu.memory_space<vmem>>, vector<12x3xf32>
    tpu.vector_store %arg2[%c0_3, %c0_4], %15 {strides = array<i32>} : memref<12x3xf32, #tpu.memory_space<vmem>>, vector<12x3xf32>,
    return
  }
}

</mosaic_0001>

<llo_original>
// kernel: model_forward.1
$region0: #{model_forward.1}
  #allocation0 [shape = 'u32[]', space=smem, size = 0x4, offset = 0x4, fixed_abs, tag = 'smem constant byte address 0x4 - core index']
  #allocation1 [shape = 'u32[144,128]{1,0:T(1,128)}', space=vmem, size = 0x12000, scoped, tag = 'internal scratch']
  %s0 = inlined_call_operand.vmem [shape: f32[12,2], index: 0, kind: input, shape index: {}]
  %s1 = inlined_call_operand.vmem [shape: f32[3,3], index: 1, kind: input, shape index: {}]
  %s2 = inlined_call_operand.vmem [shape: f32[12,3], index: 2, kind: output, shape index: {}]
  %s3 = sld [smem:[#allocation0]]
  $region18: #{model_forward.1} parent=0
    _
  %s5 = ssub.s32 1, %s3
  %s6 = scalar_select 0, %s5, %s3
  // Predicated region
  $region2: #{model_forward.1} parent=0 // pred_check
    _
  $region3: #{model_forward.1} parent=0 // pred_check_branch
    %8 = sbr.rel (0) target = $region5
  $region4: #{model_forward.1} parent=0 // pred_region
    _
  $region5: #{model_forward.1} parent=0 // pred_fallthru
    _
  // Predicated region
  $region6: #{model_forward.1} parent=0 // pred_check
    _
  $region7: #{model_forward.1} parent=0 // pred_check_branch
    %10 = sbr.rel (0) target = $region9
  $region8: #{model_forward.1} parent=0 // pred_region
    _
  $region9: #{model_forward.1} parent=0 // pred_fallthru
    _
  %v11 = vld [vmem:[%s0] sm:$0xff]
  %v12 = vld [vmem:[%s0 + $0x8] sm:$0xf]
  %v13 = vld [vmem:[%s1] sm:$0x7]
  %15 = vset.pattern.permute.xlu0 0
  %16 = vperm.xlu0 %15, %v11
  %v17 = vpop.permute.xlu0 %16
  %20 = vset.pattern.permute.xlu0 0
  %21 = vperm.xlu0 %20, %v12
  %v22 = vpop.permute.xlu0 %21
  %v24 = vlaneseq
  %v25 = vshrl.u32 %v24, 7
  %v26 = vsub.s32 0, %v25
  %v27 = vrot.slane %v13, %v26
  %v28 = vmul.f32 %v17, %v27
  %v29 = vmul.f32 %v22, %v27
  %30 = vset.pattern.permute.xlu0 1
  %31 = vperm.xlu0 %30, %v11
  %v32 = vpop.permute.xlu0 %31
  %34 = vset.pattern.permute.xlu0 1
  %35 = vperm.xlu0 %34, %v12
  %v36 = vpop.permute.xlu0 %35
  %v38 = vlaneseq
  %v39 = vshrl.u32 %v38, 7
  %v40 = vsub.s32 1, %v39
  %v41 = vrot.slane %v13, %v40
  %v42 = vmul.f32 %v32, %v41
  %v43 = vmul.f32 %v36, %v41
  %v44 = vadd.f32 %v28, %v42
  %v45 = vadd.f32 %v29, %v43
  %v46 = vlaneseq
  %v47 = vshrl.u32 %v46, 7
  %v48 = vsub.s32 2, %v47
  %v49 = vrot.slane %v13, %v48
  %v50 = vadd.f32 %v44, %v49
  %v51 = vadd.f32 %v45, %v49
  %vm52 = vcmask 23552
  %53 = vst.msk [vmem:[%s2] sm:$0xff] %vm52, %v50
  %vm54 = vcmask 19456
  %55 = vst.msk [vmem:[%s2 + $0x8] sm:$0xf] %vm54, %v51
  // Predicated region
  $region10: #{model_forward.1} parent=0 // pred_check
    _
  $region11: #{model_forward.1} parent=0 // pred_check_branch
    %57 = sbr.rel (0) target = $region13
  $region12: #{model_forward.1} parent=0 // pred_region
    _
  $region13: #{model_forward.1} parent=0 // pred_fallthru
    _
  // Predicated region
  $region14: #{model_forward.1} parent=0 // pred_check
    _
  $region15: #{model_forward.1} parent=0 // pred_check_branch
    %59 = sbr.rel (0) target = $region17
  $region16: #{model_forward.1} parent=0 // pred_region
    _
  $region17: #{model_forward.1} parent=0 // pred_fallthru
    _

</llo_original>
